<compile_context>
chip_gen: v5e
topology: v5e:2x2
jax: 0.10.0
libtpu: 0.0.40
codegen_flags: <defaults>
</compile_context>

<pallas_src>
import functools

import jax
import jax.numpy as jnp
from jax import lax
from jax.experimental import pallas as pl
from jax.experimental.pallas import tpu as pltpu

LANES = 128
MAX_BLOCK_ROWS = 2048   # (2048,128) f32 block = 1 MiB per input per buffer.
CHUNK_ROWS = 256        # strip-mine unit inside a resident block.


def _sublane_multiple(dtype):
    # Min second-minor tile for the dtype: f32 -> 8, bf16 -> 16, int8/fp8 -> 32.
    return max(8, 32 // jnp.dtype(dtype).itemsize)


def _round_up(x, m):
    return ((x + m - 1) // m) * m


def _pick_chunk(block_rows):
    for c in (CHUNK_ROWS, 128, 64, 32, 16, 8):
        if block_rows % c == 0:
            return c
    return block_rows


def _bce_dice_kernel(pred_ref, tgt_ref, out_ref, *, block_rows, chunk_rows,
                     rows_valid, blocks_per_split, first_mask_block):
    """Accumulate [bce_sum, intersection, pred_sum, target_sum] per split.

    out_ref is a (1, 4, 8, 128) f32 block, resident across the reduction axis.
    """
    c = pl.program_id(0)                 # split / core index   ("parallel")
    j = pl.program_id(1)                 # block within split   ("arbitrary")
    gblk = c * blocks_per_split + j      # logical global block index

    @pl.when(j == 0)
    def _init():
        out_ref[...] = jnp.zeros_like(out_ref)

    n_chunks = block_rows // chunk_rows

    def _accumulate(masked):
        def chunk_body(k, carry):
            bce_acc, int_acc, p_acc, t_acc = carry
            r0 = pl.multiple_of(k * chunk_rows, chunk_rows)
            x = pred_ref[pl.ds(r0, chunk_rows), :].astype(jnp.float32)
            t = tgt_ref[pl.ds(r0, chunk_rows), :].astype(jnp.float32)
            if masked:
                # Mask BEFORE any math so OOB garbage (possibly NaN/Inf) never
                # reaches exp/log1p.  sigmoid(-40)~4e-18, bce(-40,0)~4e-18.
                row = (gblk * block_rows + r0
                       + lax.broadcasted_iota(jnp.int32, x.shape, 0))
                valid = row < rows_valid
                x = jnp.where(valid, x, -40.0)
                t = jnp.where(valid, t, 0.0)

            # Share exp(-|x|) between BCE-with-logits and sigmoid:
            #   bce     = max(x,0) - x*t + log1p(e)
            #   sigmoid = where(x>=0, 1, e) / (1 + e)
            e = jnp.exp(-jnp.abs(x))
            d = 1.0 + e
            inv0 = pl.reciprocal(d, approx=True)     # EUP vrcp (free slot)
            inv = inv0 * (2.0 - d * inv0)            # one Newton step -> ~exact
            p = jnp.where(x >= 0.0, inv, e * inv)
            bce = jnp.maximum(x, 0.0) - x * t + jnp.log1p(e)

            def vsum(y):
                # (chunk_rows,128) -> (8,128): pure VPU vreg adds, no XLU.
                return jnp.sum(y.reshape(-1, 8, LANES), axis=0)

            return (bce_acc + vsum(bce), int_acc + vsum(p * t),
                    p_acc + vsum(p), t_acc + vsum(t))

        zeros = jnp.zeros((8, LANES), jnp.float32)
        bce_s, int_s, p_s, t_s = lax.fori_loop(
            0, n_chunks, chunk_body, (zeros, zeros, zeros, zeros), unroll=True)

        # Four 1-vreg read-modify-writes per grid step (vs 512 before).
        out_ref[0, 0] += bce_s
        out_ref[0, 1] += int_s
        out_ref[0, 2] += p_s
        out_ref[0, 3] += t_s

    needs_mask = gblk >= first_mask_block

    @pl.when(jnp.logical_not(needs_mask))
    def _fast():
        _accumulate(False)

    @pl.when(needs_mask)
    def _tail():
        _accumulate(True)


def _partial_sums(pred2d, tgt2d, rows, block_rows, chunk_rows):
    num_blocks = pl.cdiv(rows, block_rows)
    num_splits = 2 if num_blocks >= 2 else 1          # dual-TC split when useful
    bps = pl.cdiv(num_blocks, num_splits)             # blocks per split
    first_mask_block = rows // block_rows              # first block needing mask

    def in_map(c, j):
        # Clamp so a (rare) fully-out-of-range block re-reads the last real
        # block; its contribution is zeroed by the in-kernel mask.
        return (jnp.minimum(c * bps + j, num_blocks - 1), 0)

    kernel = functools.partial(
        _bce_dice_kernel, block_rows=block_rows, chunk_rows=chunk_rows,
        rows_valid=rows, blocks_per_split=bps, first_mask_block=first_mask_block)

    n_elems = rows * LANES
    in_bytes = n_elems * (pred2d.dtype.itemsize + tgt2d.dtype.itemsize)
    out_bytes = num_splits * 4 * 8 * LANES * 4
    cost = pl.CostEstimate(flops=15 * n_elems, transcendentals=3 * n_elems,
                           bytes_accessed=in_bytes + out_bytes)

    return pl.pallas_call(
        kernel,
        out_shape=jax.ShapeDtypeStruct((num_splits, 4, 8, LANES), jnp.float32),
        grid_spec=pltpu.PrefetchScalarGridSpec(
            num_scalar_prefetch=0,
            grid=(num_splits, bps),
            in_specs=[
                pl.BlockSpec((block_rows, LANES), in_map),
                pl.BlockSpec((block_rows, LANES), in_map),
            ],
            out_specs=pl.BlockSpec((1, 4, 8, LANES), lambda c, j: (c, 0, 0, 0)),
        ),
        compiler_params=pltpu.CompilerParams(
            dimension_semantics=("parallel", "arbitrary")),
        cost_estimate=cost,
    )(pred2d, tgt2d)


@functools.partial(jax.jit, static_argnames=("bce_weight", "dice_weight", "smooth"))
def bce_dice_loss(predictions, targets, *, bce_weight=0.5, dice_weight=0.5,
                  smooth=1e-6):
    """Combined BCEWithLogits (mean) + Dice loss (matches BCEDiceLoss.forward)."""
    n = predictions.size                        # real element count (BCE mean)

    pred_flat = predictions.reshape(-1)         # native dtype, no f32 HBM copy
    tgt_flat = targets.reshape(-1)

    lane_pad = (-n) % LANES                     # < 128 elements of padding
    if lane_pad:
        # TODO(synk): this tail pad copies the flat arrays once when n % 128
        # != 0; a 1-D BlockSpec path would avoid it, but lane-dense 2-D blocks
        # are the better trade overall (and n % 128 == 0 is the common case).
        pred_flat = jnp.pad(pred_flat, (0, lane_pad), constant_values=-40.0)
        tgt_flat = jnp.pad(tgt_flat, (0, lane_pad), constant_values=0.0)

    rows = (n + lane_pad) // LANES
    mult = max(_sublane_multiple(pred_flat.dtype), _sublane_multiple(tgt_flat.dtype))
    block_rows = min(MAX_BLOCK_ROWS, _round_up(rows, mult))
    chunk_rows = _pick_chunk(block_rows)

    pred2d = pred_flat.reshape(rows, LANES)
    tgt2d = tgt_flat.reshape(rows, LANES)

    sums = _partial_sums(pred2d, tgt2d, rows, block_rows, chunk_rows)
    totals = jnp.sum(sums, axis=(0, 2, 3))      # (4,) tiny final reduction

    bce = totals[0] / n
    dice_coeff = (2.0 * totals[1] + smooth) / (totals[2] + totals[3] + smooth)
    dice = 1.0 - dice_coeff
    return bce_weight * bce + dice_weight * dice


def _reference(predictions, targets, bce_weight=0.5, dice_weight=0.5,
               smooth=1e-6):
    """Pure-JAX reference mirroring the PyTorch module."""
    x = predictions.astype(jnp.float32).reshape(-1)
    t = targets.astype(jnp.float32).reshape(-1)
    bce = jnp.mean(jnp.maximum(x, 0.0) - x * t + jnp.log1p(jnp.exp(-jnp.abs(x))))
    p = jax.nn.sigmoid(x)
    inter = jnp.sum(p * t)
    dice = 1.0 - (2.0 * inter + smooth) / (jnp.sum(p) + jnp.sum(t) + smooth)
    return bce_weight * bce + dice_weight * dice


if __name__ == "__main__":
    key = jax.random.PRNGKey(0)
    k1, k2, k3, k4, k5, k6 = jax.random.split(key, 6)

    # Small NCHW case matching the module: logits and binary targets.
    x1 = jax.random.normal(k1, (2, 4, 16, 16), dtype=jnp.float32)
    t1 = (jax.random.uniform(k2, (2, 4, 16, 16)) > 0.5).astype(jnp.float32)
    l1 = bce_dice_loss(x1, t1)
    jax.block_until_ready(l1)
    assert jnp.allclose(l1, _reference(x1, t1), rtol=1e-5, atol=1e-5), (l1, _reference(x1, t1))

    # Medium case: exercises the 2-way split grid and the masked tail block.
    x2 = jax.random.normal(k3, (4, 1, 288, 288), dtype=jnp.float32)
    t2 = (jax.random.uniform(k4, (4, 1, 288, 288)) > 0.5).astype(jnp.float32)
    l2 = bce_dice_loss(x2, t2)
    jax.block_until_ready(l2)
    assert jnp.allclose(l2, _reference(x2, t2), rtol=1e-5, atol=1e-5), (l2, _reference(x2, t2))

    # Ragged case: exercises the <128-element lane-tail path.
    x3 = jax.random.normal(k5, (2, 3, 17, 19), dtype=jnp.float32)
    t3 = (jax.random.uniform(k6, (2, 3, 17, 19)) > 0.5).astype(jnp.float32)
    l3 = bce_dice_loss(x3, t3)
    jax.block_until_ready(l3)
    assert jnp.allclose(l3, _reference(x3, t3), rtol=1e-5, atol=1e-5), (l3, _reference(x3, t3))

    print("KERNEL_OK")
</pallas_src>

<mosaic_0001>
module attributes {stable_mosaic.version = 11 : i64} {
  func.func @_bce_dice_kernel(%arg0: i32, %arg1: i32, %arg2: memref<16x128xf32, #tpu.memory_space<vmem>>, %arg3: memref<16x128xf32, #tpu.memory_space<vmem>>, %arg4: memref<1x4x8x128xf32, #tpu.memory_space<vmem>>) attributes {dimension_semantics = [#tpu.dimension_semantics<parallel>, #tpu.dimension_semantics<arbitrary>], iteration_bounds = array<i64: 1, 1>, scalar_prefetch = 0 : i64, scratch_operands = 0 : i64, tpu.core_type = #tpu.core_type<tc>, window_params = [{transform_indices = @transform_0, window_bounds = array<i64: 16, 128>}, {transform_indices = @transform_1, window_bounds = array<i64: 16, 128>}, {transform_indices = @transform_2, window_bounds = array<i64: 1, 4, 8, 128>}]} {
    %c1_i32 = arith.constant 1 : i32
    %0 = arith.muli %arg0, %c1_i32 : i32
    %1 = arith.addi %0, %arg1 : i32
    %c0_i32 = arith.constant 0 : i32
    %2 = arith.cmpi eq, %arg1, %c0_i32 : i32
    %3 = arith.extui %2 : i1 to i32
    %c0_i32_0 = arith.constant 0 : i32
    %4 = arith.cmpi ne, %3, %c0_i32_0 : i32
    scf.if %4 {
      %cst = arith.constant 0.000000e+00 : f32
      %11 = vector.broadcast %cst : f32 to vector<1x4x8x128xf32>
      %c0 = arith.constant 0 : index
      %c0_4 = arith.constant 0 : index
      %c0_5 = arith.constant 0 : index
      %c0_6 = arith.constant 0 : index
      %12 = vector.load %arg4[%c0, %c0_4, %c0_5, %c0_6] : memref<1x4x8x128xf32, #tpu.memory_space<vmem>>, vector<1x4x8x128xf32>
      tpu.vector_store %arg4[%c0, %c0_4, %c0_5, %c0_6], %11 {strides = array<i32>} : memref<1x4x8x128xf32, #tpu.memory_space<vmem>>, vector<1x4x8x128xf32>,
    } else {
    }
    %c1_i32_1 = arith.constant 1 : i32
    %5 = arith.cmpi sge, %1, %c1_i32_1 : i32
    %true = arith.constant true
    %6 = arith.xori %5, %true : i1
    %7 = arith.extui %6 : i1 to i32
    %c0_i32_2 = arith.constant 0 : i32
    %8 = arith.cmpi ne, %7, %c0_i32_2 : i32
    scf.if %8 {
      %cst = arith.constant 0.000000e+00 : f32
      %11 = vector.broadcast %cst : f32 to vector<8x128xf32>
      %c0_i32_4 = arith.constant 0 : i32
      %c16_i32 = arith.constant 16 : i32
      %12 = arith.muli %c0_i32_4, %c16_i32 : i32
      %13 = tpu.assume_multiple %12, 16 : i32
      %14 = arith.index_cast %13 : i32 to index
      %c0 = arith.constant 0 : index
      %15 = vector.load %arg2[%14, %c0] : memref<16x128xf32, #tpu.memory_space<vmem>>, vector<16x128xf32>
      %16 = arith.index_cast %13 : i32 to index
      %c0_5 = arith.constant 0 : index
      %17 = vector.load %arg3[%16, %c0_5] : memref<16x128xf32, #tpu.memory_space<vmem>>, vector<16x128xf32>
      %18 = math.absf %15 : vector<16x128xf32>
      %cst_6 = arith.constant 0.000000e+00 : f32
      %19 = vector.broadcast %cst_6 : f32 to vector<16x128xf32>
      %20 = arith.subf %19, %18 : vector<16x128xf32>
      %21 = math.exp %20 : vector<16x128xf32>
      %cst_7 = arith.constant 1.000000e+00 : f32
      %22 = vector.broadcast %cst_7 : f32 to vector<16x128xf32>
      %23 = arith.addf %22, %21 : vector<16x128xf32>
      %24 = tpu.reciprocal %23 {approx = true} : vector<16x128xf32> -> vector<16x128xf32>
      %25 = arith.mulf %23, %24 : vector<16x128xf32>
      %cst_8 = arith.constant 2.000000e+00 : f32
      %26 = vector.broadcast %cst_8 : f32 to vector<16x128xf32>
      %27 = arith.subf %26, %25 : vector<16x128xf32>
      %28 = arith.mulf %24, %27 : vector<16x128xf32>
      %cst_9 = arith.constant 0.000000e+00 : f32
      %29 = vector.broadcast %cst_9 : f32 to vector<16x128xf32>
      %30 = arith.cmpf oge, %15, %29 : vector<16x128xf32>
      %31 = arith.mulf %21, %28 : vector<16x128xf32>
      %32 = arith.select %30, %28, %31 : vector<16x128xi1>, vector<16x128xf32>
      %cst_10 = arith.constant 0.000000e+00 : f32
      %33 = vector.broadcast %cst_10 : f32 to vector<16x128xf32>
      %34 = arith.maximumf %15, %33 : vector<16x128xf32>
      %35 = arith.mulf %15, %17 : vector<16x128xf32>
      %36 = arith.subf %34, %35 : vector<16x128xf32>
      %37 = math.log1p %21 : vector<16x128xf32>
      %38 = arith.addf %36, %37 : vector<16x128xf32>
      %39 = vector.shape_cast %38 : vector<16x128xf32> to vector<2x8x128xf32>
      %cst_11 = arith.constant dense<0.000000e+00> : vector<8x128xf32>
      %40 = vector.multi_reduction <add>, %39, %cst_11 [0] : vector<2x8x128xf32> to vector<8x128xf32>
      %41 = arith.addf %11, %40 : vector<8x128xf32>
      %42 = arith.mulf %32, %17 : vector<16x128xf32>
      %43 = vector.shape_cast %42 : vector<16x128xf32> to vector<2x8x128xf32>
      %cst_12 = arith.constant dense<0.000000e+00> : vector<8x128xf32>
      %44 = vector.multi_reduction <add>, %43, %cst_12 [0] : vector<2x8x128xf32> to vector<8x128xf32>
      %45 = arith.addf %11, %44 : vector<8x128xf32>
      %46 = vector.shape_cast %32 : vector<16x128xf32> to vector<2x8x128xf32>
      %cst_13 = arith.constant dense<0.000000e+00> : vector<8x128xf32>
      %47 = vector.multi_reduction <add>, %46, %cst_13 [0] : vector<2x8x128xf32> to vector<8x128xf32>
      %48 = arith.addf %11, %47 : vector<8x128xf32>
      %49 = vector.shape_cast %17 : vector<16x128xf32> to vector<2x8x128xf32>
      %cst_14 = arith.constant dense<0.000000e+00> : vector<8x128xf32>
      %50 = vector.multi_reduction <add>, %49, %cst_14 [0] : vector<2x8x128xf32> to vector<8x128xf32>
      %51 = arith.addf %11, %50 : vector<8x128xf32>
      %c1_i32_15 = arith.constant 1 : i32
      %c0_16 = arith.constant 0 : index
      %c0_17 = arith.constant 0 : index
      %c0_18 = arith.constant 0 : index
      %c0_19 = arith.constant 0 : index
      %52 = vector.load %arg4[%c0_16, %c0_17, %c0_18, %c0_19] : memref<1x4x8x128xf32, #tpu.memory_space<vmem>>, vector<1x1x8x128xf32>
      %53 = vector.shape_cast %52 : vector<1x1x8x128xf32> to vector<8x128xf32>
      %54 = arith.addf %53, %41 : vector<8x128xf32>
      %c0_20 = arith.constant 0 : index
      %c0_21 = arith.constant 0 : index
      %c0_22 = arith.constant 0 : index
      %c0_23 = arith.constant 0 : index
      %55 = vector.load %arg4[%c0_20, %c0_21, %c0_22, %c0_23] : memref<1x4x8x128xf32, #tpu.memory_space<vmem>>, vector<1x1x8x128xf32>
      %56 = vector.shape_cast %55 : vector<1x1x8x128xf32> to vector<8x128xf32>
      %57 = vector.shape_cast %54 : vector<8x128xf32> to vector<1x1x8x128xf32>
      tpu.vector_store %arg4[%c0_20, %c0_21, %c0_22, %c0_23], %57 {strides = array<i32>} : memref<1x4x8x128xf32, #tpu.memory_space<vmem>>, vector<1x1x8x128xf32>,
      %c0_24 = arith.constant 0 : index
      %c1 = arith.constant 1 : index
      %c0_25 = arith.constant 0 : index
      %c0_26 = arith.constant 0 : index
      %58 = vector.load %arg4[%c0_24, %c1, %c0_25, %c0_26] : memref<1x4x8x128xf32, #tpu.memory_space<vmem>>, vector<1x1x8x128xf32>
      %59 = vector.shape_cast %58 : vector<1x1x8x128xf32> to vector<8x128xf32>
      %60 = arith.addf %59, %45 : vector<8x128xf32>
      %c0_27 = arith.constant 0 : index
      %c1_28 = arith.constant 1 : index
      %c0_29 = arith.constant 0 : index
      %c0_30 = arith.constant 0 : index
      %61 = vector.load %arg4[%c0_27, %c1_28, %c0_29, %c0_30] : memref<1x4x8x128xf32, #tpu.memory_space<vmem>>, vector<1x1x8x128xf32>
      %62 = vector.shape_cast %61 : vector<1x1x8x128xf32> to vector<8x128xf32>
      %63 = vector.shape_cast %60 : vector<8x128xf32> to vector<1x1x8x128xf32>
      tpu.vector_store %arg4[%c0_27, %c1_28, %c0_29, %c0_30], %63 {strides = array<i32>} : memref<1x4x8x128xf32, #tpu.memory_space<vmem>>, vector<1x1x8x128xf32>,
      %c0_31 = arith.constant 0 : index
      %c2 = arith.constant 2 : index
      %c0_32 = arith.constant 0 : index
      %c0_33 = arith.constant 0 : index
      %64 = vector.load %arg4[%c0_31, %c2, %c0_32, %c0_33] : memref<1x4x8x128xf32, #tpu.memory_space<vmem>>, vector<1x1x8x128xf32>
      %65 = vector.shape_cast %64 : vector<1x1x8x128xf32> to vector<8x128xf32>
      %66 = arith.addf %65, %48 : vector<8x128xf32>
      %c0_34 = arith.constant 0 : index
      %c2_35 = arith.constant 2 : index
      %c0_36 = arith.constant 0 : index
      %c0_37 = arith.constant 0 : index
      %67 = vector.load %arg4[%c0_34, %c2_35, %c0_36, %c0_37] : memref<1x4x8x128xf32, #tpu.memory_space<vmem>>, vector<1x1x8x128xf32>
      %68 = vector.shape_cast %67 : vector<1x1x8x128xf32> to vector<8x128xf32>
      %69 = vector.shape_cast %66 : vector<8x128xf32> to vector<1x1x8x128xf32>
      tpu.vector_store %arg4[%c0_34, %c2_35, %c0_36, %c0_37], %69 {strides = array<i32>} : memref<1x4x8x128xf32, #tpu.memory_space<vmem>>, vector<1x1x8x128xf32>,
      %c0_38 = arith.constant 0 : index
      %c3 = arith.constant 3 : index
      %c0_39 = arith.constant 0 : index
      %c0_40 = arith.constant 0 : index
      %70 = vector.load %arg4[%c0_38, %c3, %c0_39, %c0_40] : memref<1x4x8x128xf32, #tpu.memory_space<vmem>>, vector<1x1x8x128xf32>
      %71 = vector.shape_cast %70 : vector<1x1x8x128xf32> to vector<8x128xf32>
      %72 = arith.addf %71, %51 : vector<8x128xf32>
      %c0_41 = arith.constant 0 : index
      %c3_42 = arith.constant 3 : index
      %c0_43 = arith.constant 0 : index
      %c0_44 = arith.constant 0 : index
      %73 = vector.load %arg4[%c0_41, %c3_42, %c0_43, %c0_44] : memref<1x4x8x128xf32, #tpu.memory_space<vmem>>, vector<1x1x8x128xf32>
      %74 = vector.shape_cast %73 : vector<1x1x8x128xf32> to vector<8x128xf32>
      %75 = vector.shape_cast %72 : vector<8x128xf32> to vector<1x1x8x128xf32>
      tpu.vector_store %arg4[%c0_41, %c3_42, %c0_43, %c0_44], %75 {strides = array<i32>} : memref<1x4x8x128xf32, #tpu.memory_space<vmem>>, vector<1x1x8x128xf32>,
    } else {
    }
    %9 = arith.extui %5 : i1 to i32
    %c0_i32_3 = arith.constant 0 : i32
    %10 = arith.cmpi ne, %9, %c0_i32_3 : i32
    scf.if %10 {
      %cst = arith.constant 0.000000e+00 : f32
      %11 = vector.broadcast %cst : f32 to vector<8x128xf32>
      %c0_i32_4 = arith.constant 0 : i32
      %c16_i32 = arith.constant 16 : i32
      %12 = arith.muli %c0_i32_4, %c16_i32 : i32
      %13 = tpu.assume_multiple %12, 16 : i32
      %14 = arith.index_cast %13 : i32 to index
      %c0 = arith.constant 0 : index
      %15 = vector.load %arg2[%14, %c0] : memref<16x128xf32, #tpu.memory_space<vmem>>, vector<16x128xf32>
      %16 = arith.index_cast %13 : i32 to index
      %c0_5 = arith.constant 0 : index
      %17 = vector.load %arg3[%16, %c0_5] : memref<16x128xf32, #tpu.memory_space<vmem>>, vector<16x128xf32>
      %c16_i32_6 = arith.constant 16 : i32
      %18 = arith.muli %1, %c16_i32_6 : i32
      %19 = arith.addi %18, %13 : i32
      %20 = tpu.iota {dimensions = array<i32: 0>} : vector<16x128xi32>
      %21 = vector.broadcast %19 : i32 to vector<16x128xi32>
      %22 = arith.addi %21, %20 : vector<16x128xi32>
      %c16_i32_7 = arith.constant 16 : i32
      %23 = vector.broadcast %c16_i32_7 : i32 to vector<16x128xi32>
      %24 = arith.cmpi slt, %22, %23 : vector<16x128xi32>
      %cst_8 = arith.constant -4.000000e+01 : f32
      %25 = vector.broadcast %cst_8 : f32 to vector<16x128xf32>
      %26 = arith.select %24, %15, %25 : vector<16x128xi1>, vector<16x128xf32>
      %cst_9 = arith.constant 0.000000e+00 : f32
      %27 = vector.broadcast %cst_9 : f32 to vector<16x128xf32>
      %28 = arith.select %24, %17, %27 : vector<16x128xi1>, vector<16x128xf32>
      %29 = math.absf %26 : vector<16x128xf32>
      %cst_10 = arith.constant 0.000000e+00 : f32
      %30 = vector.broadcast %cst_10 : f32 to vector<16x128xf32>
      %31 = arith.subf %30, %29 : vector<16x128xf32>
      %32 = math.exp %31 : vector<16x128xf32>
      %cst_11 = arith.constant 1.000000e+00 : f32
      %33 = vector.broadcast %cst_11 : f32 to vector<16x128xf32>
      %34 = arith.addf %33, %32 : vector<16x128xf32>
      %35 = tpu.reciprocal %34 {approx = true} : vector<16x128xf32> -> vector<16x128xf32>
      %36 = arith.mulf %34, %35 : vector<16x128xf32>
      %cst_12 = arith.constant 2.000000e+00 : f32
      %37 = vector.broadcast %cst_12 : f32 to vector<16x128xf32>
      %38 = arith.subf %37, %36 : vector<16x128xf32>
      %39 = arith.mulf %35, %38 : vector<16x128xf32>
      %cst_13 = arith.constant 0.000000e+00 : f32
      %40 = vector.broadcast %cst_13 : f32 to vector<16x128xf32>
      %41 = arith.cmpf oge, %26, %40 : vector<16x128xf32>
      %42 = arith.mulf %32, %39 : vector<16x128xf32>
      %43 = arith.select %41, %39, %42 : vector<16x128xi1>, vector<16x128xf32>
      %cst_14 = arith.constant 0.000000e+00 : f32
      %44 = vector.broadcast %cst_14 : f32 to vector<16x128xf32>
      %45 = arith.maximumf %26, %44 : vector<16x128xf32>
      %46 = arith.mulf %26, %28 : vector<16x128xf32>
      %47 = arith.subf %45, %46 : vector<16x128xf32>
      %48 = math.log1p %32 : vector<16x128xf32>
      %49 = arith.addf %47, %48 : vector<16x128xf32>
      %50 = vector.shape_cast %49 : vector<16x128xf32> to vector<2x8x128xf32>
      %cst_15 = arith.constant dense<0.000000e+00> : vector<8x128xf32>
      %51 = vector.multi_reduction <add>, %50, %cst_15 [0] : vector<2x8x128xf32> to vector<8x128xf32>
      %52 = arith.addf %11, %51 : vector<8x128xf32>
      %53 = arith.mulf %43, %28 : vector<16x128xf32>
      %54 = vector.shape_cast %53 : vector<16x128xf32> to vector<2x8x128xf32>
      %cst_16 = arith.constant dense<0.000000e+00> : vector<8x128xf32>
      %55 = vector.multi_reduction <add>, %54, %cst_16 [0] : vector<2x8x128xf32> to vector<8x128xf32>
      %56 = arith.addf %11, %55 : vector<8x128xf32>
      %57 = vector.shape_cast %43 : vector<16x128xf32> to vector<2x8x128xf32>
      %cst_17 = arith.constant dense<0.000000e+00> : vector<8x128xf32>
      %58 = vector.multi_reduction <add>, %57, %cst_17 [0] : vector<2x8x128xf32> to vector<8x128xf32>
      %59 = arith.addf %11, %58 : vector<8x128xf32>
      %60 = vector.shape_cast %28 : vector<16x128xf32> to vector<2x8x128xf32>
      %cst_18 = arith.constant dense<0.000000e+00> : vector<8x128xf32>
      %61 = vector.multi_reduction <add>, %60, %cst_18 [0] : vector<2x8x128xf32> to vector<8x128xf32>
      %62 = arith.addf %11, %61 : vector<8x128xf32>
      %c1_i32_19 = arith.constant 1 : i32
      %c0_20 = arith.constant 0 : index
      %c0_21 = arith.constant 0 : index
      %c0_22 = arith.constant 0 : index
      %c0_23 = arith.constant 0 : index
      %63 = vector.load %arg4[%c0_20, %c0_21, %c0_22, %c0_23] : memref<1x4x8x128xf32, #tpu.memory_space<vmem>>, vector<1x1x8x128xf32>
      %64 = vector.shape_cast %63 : vector<1x1x8x128xf32> to vector<8x128xf32>
      %65 = arith.addf %64, %52 : vector<8x128xf32>
      %c0_24 = arith.constant 0 : index
      %c0_25 = arith.constant 0 : index
      %c0_26 = arith.constant 0 : index
      %c0_27 = arith.constant 0 : index
      %66 = vector.load %arg4[%c0_24, %c0_25, %c0_26, %c0_27] : memref<1x4x8x128xf32, #tpu.memory_space<vmem>>, vector<1x1x8x128xf32>
      %67 = vector.shape_cast %66 : vector<1x1x8x128xf32> to vector<8x128xf32>
      %68 = vector.shape_cast %65 : vector<8x128xf32> to vector<1x1x8x128xf32>
      tpu.vector_store %arg4[%c0_24, %c0_25, %c0_26, %c0_27], %68 {strides = array<i32>} : memref<1x4x8x128xf32, #tpu.memory_space<vmem>>, vector<1x1x8x128xf32>,
      %c0_28 = arith.constant 0 : index
      %c1 = arith.constant 1 : index
      %c0_29 = arith.constant 0 : index
      %c0_30 = arith.constant 0 : index
      %69 = vector.load %arg4[%c0_28, %c1, %c0_29, %c0_30] : memref<1x4x8x128xf32, #tpu.memory_space<vmem>>, vector<1x1x8x128xf32>
      %70 = vector.shape_cast %69 : vector<1x1x8x128xf32> to vector<8x128xf32>
      %71 = arith.addf %70, %56 : vector<8x128xf32>
      %c0_31 = arith.constant 0 : index
      %c1_32 = arith.constant 1 : index
      %c0_33 = arith.constant 0 : index
      %c0_34 = arith.constant 0 : index
      %72 = vector.load %arg4[%c0_31, %c1_32, %c0_33, %c0_34] : memref<1x4x8x128xf32, #tpu.memory_space<vmem>>, vector<1x1x8x128xf32>
      %73 = vector.shape_cast %72 : vector<1x1x8x128xf32> to vector<8x128xf32>
      %74 = vector.shape_cast %71 : vector<8x128xf32> to vector<1x1x8x128xf32>
      tpu.vector_store %arg4[%c0_31, %c1_32, %c0_33, %c0_34], %74 {strides = array<i32>} : memref<1x4x8x128xf32, #tpu.memory_space<vmem>>, vector<1x1x8x128xf32>,
      %c0_35 = arith.constant 0 : index
      %c2 = arith.constant 2 : index
      %c0_36 = arith.constant 0 : index
      %c0_37 = arith.constant 0 : index
      %75 = vector.load %arg4[%c0_35, %c2, %c0_36, %c0_37] : memref<1x4x8x128xf32, #tpu.memory_space<vmem>>, vector<1x1x8x128xf32>
      %76 = vector.shape_cast %75 : vector<1x1x8x128xf32> to vector<8x128xf32>
      %77 = arith.addf %76, %59 : vector<8x128xf32>
      %c0_38 = arith.constant 0 : index
      %c2_39 = arith.constant 2 : index
      %c0_40 = arith.constant 0 : index
      %c0_41 = arith.constant 0 : index
      %78 = vector.load %arg4[%c0_38, %c2_39, %c0_40, %c0_41] : memref<1x4x8x128xf32, #tpu.memory_space<vmem>>, vector<1x1x8x128xf32>
      %79 = vector.shape_cast %78 : vector<1x1x8x128xf32> to vector<8x128xf32>
      %80 = vector.shape_cast %77 : vector<8x128xf32> to vector<1x1x8x128xf32>
      tpu.vector_store %arg4[%c0_38, %c2_39, %c0_40, %c0_41], %80 {strides = array<i32>} : memref<1x4x8x128xf32, #tpu.memory_space<vmem>>, vector<1x1x8x128xf32>,
      %c0_42 = arith.constant 0 : index
      %c3 = arith.constant 3 : index
      %c0_43 = arith.constant 0 : index
      %c0_44 = arith.constant 0 : index
      %81 = vector.load %arg4[%c0_42, %c3, %c0_43, %c0_44] : memref<1x4x8x128xf32, #tpu.memory_space<vmem>>, vector<1x1x8x128xf32>
      %82 = vector.shape_cast %81 : vector<1x1x8x128xf32> to vector<8x128xf32>
      %83 = arith.addf %82, %62 : vector<8x128xf32>
      %c0_45 = arith.constant 0 : index
      %c3_46 = arith.constant 3 : index
      %c0_47 = arith.constant 0 : index
      %c0_48 = arith.constant 0 : index
      %84 = vector.load %arg4[%c0_45, %c3_46, %c0_47, %c0_48] : memref<1x4x8x128xf32, #tpu.memory_space<vmem>>, vector<1x1x8x128xf32>
      %85 = vector.shape_cast %84 : vector<1x1x8x128xf32> to vector<8x128xf32>
      %86 = vector.shape_cast %83 : vector<8x128xf32> to vector<1x1x8x128xf32>
      tpu.vector_store %arg4[%c0_45, %c3_46, %c0_47, %c0_48], %86 {strides = array<i32>} : memref<1x4x8x128xf32, #tpu.memory_space<vmem>>, vector<1x1x8x128xf32>,
    } else {
    }
    return
  }
  func.func @transform_0(%arg0: i32, %arg1: i32) -> (i32, i32) {
    %c1_i32 = arith.constant 1 : i32
    %0 = arith.muli %arg0, %c1_i32 : i32
    %1 = arith.addi %0, %arg1 : i32
    %c0_i32 = arith.constant 0 : i32
    %2 = arith.minsi %1, %c0_i32 : i32
    %c0_i32_0 = arith.constant 0 : i32
    %c0_i32_1 = arith.constant 0 : i32
    return %2, %c0_i32_0 : i32, i32
  }
  func.func @transform_1(%arg0: i32, %arg1: i32) -> (i32, i32) {
    %c1_i32 = arith.constant 1 : i32
    %0 = arith.muli %arg0, %c1_i32 : i32
    %1 = arith.addi %0, %arg1 : i32
    %c0_i32 = arith.constant 0 : i32
    %2 = arith.minsi %1, %c0_i32 : i32
    %c0_i32_0 = arith.constant 0 : i32
    %c0_i32_1 = arith.constant 0 : i32
    return %2, %c0_i32_0 : i32, i32
  }
  func.func @transform_2(%arg0: i32, %arg1: i32) -> (i32, i32, i32, i32) {
    %c0_i32 = arith.constant 0 : i32
    %c0_i32_0 = arith.constant 0 : i32
    %c0_i32_1 = arith.constant 0 : i32
    %c0_i32_2 = arith.constant 0 : i32
    return %arg0, %c0_i32, %c0_i32_0, %c0_i32_1 : i32, i32, i32, i32
  }
}

</mosaic_0001>

<llo_original>
// kernel: bce_dice_loss.1
$region0: #{bce_dice_loss.1}
  #allocation0 [shape = 'u32[]', space=smem, size = 0x4, offset = 0x4, fixed_abs, tag = 'smem constant byte address 0x4 - core index']
  #allocation1 [shape = 'u32[72,128]{1,0:T(1,128)}', space=vmem, size = 0x9000, scoped, tag = 'internal scratch']
  %s0 = inlined_call_operand.vmem [shape: f32[16,128], index: 0, kind: input, shape index: {}]
  %s1 = inlined_call_operand.vmem [shape: f32[16,128], index: 1, kind: input, shape index: {}]
  %s2 = inlined_call_operand.vmem [shape: f32[1,4,8,128], index: 2, kind: output, shape index: {}]
  %s3 = sld [smem:[#allocation0]]
  $region30: #{bce_dice_loss.1} parent=0
    _
  %s5 = ssub.s32 1, %s3
  %s6 = scalar_select 0, %s5, %s3
  // Predicated region
  $region2: #{bce_dice_loss.1} parent=0 // pred_check
    _
  $region3: #{bce_dice_loss.1} parent=0 // pred_check_branch
    %8 = sbr.rel (0) target = $region5
  $region4: #{bce_dice_loss.1} parent=0 // pred_region
    %s9 = sadd.s32 0, 0
    %p10 = scmp.lt.s32.totalorder %s9, 0
    %s11 = scalar_select %p10, %s9, 0
    %s12 = smul.u32 2, %s11
    %p13 = scmp.lt.s32.totalorder %s12, 1
    %s14 = scalar_select %p13, %s12, 1
    %s15 = smul.addr %s14, 8
    %s16 = scalar_lea.vmem %s0, %s15
    %s17 = sadd.s32 0, 0
    %p18 = scmp.lt.s32.totalorder %s17, 0
    %s19 = scalar_select %p18, %s17, 0
    %s20 = smul.u32 2, %s19
  $region5: #{bce_dice_loss.1} parent=0 // pred_fallthru
    _
  // Predicated region
  $region6: #{bce_dice_loss.1} parent=0 // pred_check
    _
  $region7: #{bce_dice_loss.1} parent=0 // pred_check_branch
    %22 = sbr.rel (0) target = $region9
  $region8: #{bce_dice_loss.1} parent=0 // pred_region
    %s23 = sadd.s32 0, 0
    %p24 = scmp.lt.s32.totalorder %s23, 0
    %s25 = scalar_select %p24, %s23, 0
    %s26 = smul.u32 2, %s25
    %p27 = scmp.lt.s32.totalorder %s26, 1
    %s28 = scalar_select %p27, %s26, 1
    %s29 = smul.addr %s28, 8
    %s30 = scalar_lea.vmem %s1, %s29
    %s31 = sadd.s32 0, 0
    %p32 = scmp.lt.s32.totalorder %s31, 0
    %s33 = scalar_select %p32, %s31, 0
    %s34 = smul.u32 2, %s33
  $region9: #{bce_dice_loss.1} parent=0 // pred_fallthru
    _
  %s35 = sadd.s32 0, 0
  %p36 = scmp.lt.s32.totalorder %s35, 0
  %s37 = scalar_select %p36, %s35, 0
  %s38 = smul.u32 2, %s37
  %p39 = scmp.lt.s32.totalorder %s38, 1
  %s40 = scalar_select %p39, %s38, 1
  %s41 = smul.addr %s40, 8
  %s42 = scalar_lea.vmem %s0, %s41
  %s43 = sadd.s32 0, 0
  %p44 = scmp.lt.s32.totalorder %s43, 0
  %s45 = scalar_select %p44, %s43, 0
  %s46 = smul.u32 2, %s45
  %p47 = scmp.lt.s32.totalorder %s46, 1
  %s48 = scalar_select %p47, %s46, 1
  %s49 = smul.addr %s48, 8
  %s50 = scalar_lea.vmem %s1, %s49
  %s51 = sadd.s32 0, 0
  %p52 = scmp.lt.s32.totalorder %s51, 0
  %s53 = scalar_select %p52, %s51, 0
  %s54 = smul.u32 2, %s53
  %p55 = scmp.lt.s32.totalorder %s54, 1
  %s56 = scalar_select %p55, %s54, 1
  %s57 = smul.addr %s56, 8
  %s58 = scalar_lea.vmem %s0, %s57
  %s59 = sadd.s32 0, 0
  %p60 = scmp.lt.s32.totalorder %s59, 0
  %s61 = scalar_select %p60, %s59, 0
  %s62 = smul.u32 2, %s61
  %s63 = sadd.s32 0, 0
  %p64 = scmp.lt.s32.totalorder %s63, 0
  %s65 = scalar_select %p64, %s63, 0
  %s66 = smul.u32 2, %s65
  %p67 = scmp.lt.s32.totalorder %s66, 1
  %s68 = scalar_select %p67, %s66, 1
  %s69 = smul.addr %s68, 8
  %s70 = scalar_lea.vmem %s1, %s69
  %s71 = sadd.s32 0, 0
  %p72 = scmp.lt.s32.totalorder %s71, 0
  %s73 = scalar_select %p72, %s71, 0
  %s74 = smul.u32 2, %s73
  %s75 = sadd.s32 0, 0
  %p76 = scmp.eq.s32.totalorder 0, 0
  // Predicated region
  $region10: #{bce_dice_loss.1} parent=0 // pred_check
    %p77 = pneg %p76
  $region11: #{bce_dice_loss.1} parent=0 // pred_check_branch
    %79 = sbr.rel (%p77) target = $region13
  $region12: #{bce_dice_loss.1} parent=0 // pred_region
    %80 = vst [vmem:[%s2] sm:$0xff] 0.0
    %81 = vst [vmem:[%s2 + $0x8] sm:$0xff] 0.0
    %82 = vst [vmem:[%s2 + $0x10] sm:$0xff] 0.0
    %83 = vst [vmem:[%s2 + $0x18] sm:$0xff] 0.0
  $region13: #{bce_dice_loss.1} parent=0 // pred_fallthru
    _
  %p84 = scmp.ge.s32.totalorder %s75, 1
  %p85 = scmp.lt.s32.totalorder %s75, 1
  // Predicated region
  $region14: #{bce_dice_loss.1} parent=0 // pred_check
    %p86 = pneg %p85
  $region15: #{bce_dice_loss.1} parent=0 // pred_check_branch
    %88 = sbr.rel (%p86) target = $region17
  $region16: #{bce_dice_loss.1} parent=0 // pred_region
    %v89 = vld [vmem:[%s58] sm:$0xff]
    %v90 = vld [vmem:[%s58 + $0x8] sm:$0xff]
    %v91 = vld [vmem:[%s70] sm:$0xff]
    %v92 = vld [vmem:[%s70 + $0x8] sm:$0xff]
    %v93 = vand.u32 2147483647, %v89
    %v94 = vand.u32 2147483647, %v90
    %v95 = vsub.f32 0.0, %v93
    %v96 = vsub.f32 0.0, %v94
    %v97 = vmul.f32 %v95, 1.442695
    %v98 = vpow.pop %v97
    %v99 = vmul.f32 %v96, 1.442695
    %v100 = vpow.pop %v99
    %v101 = vadd.f32 %v98, 1.0
    %v102 = vadd.f32 %v100, 1.0
    %v103 = vrcp.pop %v101
    %v104 = vrcp.pop %v102
    %v105 = vmul.f32 %v101, %v103
    %v106 = vmul.f32 %v102, %v104
    %v107 = vsub.f32 2.0, %v105
    %v108 = vsub.f32 2.0, %v106
    %v109 = vmul.f32 %v103, %v107
    %v110 = vmul.f32 %v104, %v108
    %vm111 = vcmp.ge.f32.partialorder %v89, 0.0
    %vm112 = vcmp.ge.f32.partialorder %v90, 0.0
    %v113 = vmul.f32 %v98, %v109
    %v114 = vmul.f32 %v100, %v110
    %v115 = vsel %vm111, %v109, %v113
    %v116 = vsel %vm112, %v110, %v114
    %v117 = vmax.f32 %v89, 0.0
    %v118 = vmax.f32 %v90, 0.0
    %v119 = vmul.f32 %v89, %v91
    %v120 = vmul.f32 %v90, %v92
    %v121 = vsub.f32 %v117, %v119
    %v122 = vsub.f32 %v118, %v120
    %v123 = vadd.f32 %v98, 1.0
    %v124 = vlog2.pop %v123
    %v125 = vmul.f32 %v124, 0.6931472
    %v126 = vmul.f32 -0.5, %v98
    %v127 = vadd.f32 %v126, 1.0
    %v128 = vmul.f32 %v127, %v98
    %v129 = vand.u32 2147483647, %v98
    %vm130 = vcmp.lt.f32.partialorder %v129, 0.0004427343
    %v131 = vsel %vm130, %v128, %v125
    %v132 = vadd.f32 %v100, 1.0
    %v133 = vlog2.pop %v132
    %v134 = vmul.f32 %v133, 0.6931472
    %v135 = vmul.f32 -0.5, %v100
    %v136 = vadd.f32 %v135, 1.0
    %v137 = vmul.f32 %v136, %v100
    %v138 = vand.u32 2147483647, %v100
    %vm139 = vcmp.lt.f32.partialorder %v138, 0.0004427343
    %v140 = vsel %vm139, %v137, %v134
    %v141 = vadd.f32 %v121, %v131
    %v142 = vadd.f32 %v122, %v140
    %v143 = vadd.f32 %v141, %v142
    %v144 = vadd.f32 %v143, 0.0
    %v145 = vmul.f32 %v115, %v91
    %v146 = vmul.f32 %v116, %v92
    %v147 = vadd.f32 %v145, %v146
    %v148 = vadd.f32 %v147, 0.0
    %v149 = vadd.f32 %v115, %v116
    %v150 = vadd.f32 %v149, 0.0
    %v151 = vadd.f32 %v91, %v92
    %v152 = vadd.f32 %v151, 0.0
    %v153 = vld [vmem:[%s2] sm:$0xff]
    %v154 = vadd.f32 %v153, %v144
    %155 = vst [vmem:[%s2] sm:$0xff] %v154
    %s156 = scalar_lea.vmem %s2, 8
    %v157 = vld [vmem:[%s156] sm:$0xff]
    %v158 = vadd.f32 %v157, %v148
    %159 = vst [vmem:[%s156] sm:$0xff] %v158
    %s160 = scalar_lea.vmem %s2, 16
    %v161 = vld [vmem:[%s160] sm:$0xff]
    %v162 = vadd.f32 %v161, %v150
    %163 = vst [vmem:[%s160] sm:$0xff] %v162
    %s164 = scalar_lea.vmem %s2, 24
    %v165 = vld [vmem:[%s164] sm:$0xff]
    %v166 = vadd.f32 %v165, %v152
    %167 = vst [vmem:[%s164] sm:$0xff] %v166
  $region17: #{bce_dice_loss.1} parent=0 // pred_fallthru
    _
  // Predicated region
  $region18: #{bce_dice_loss.1} parent=0 // pred_check
    %p168 = pneg %p84
  $region19: #{bce_dice_loss.1} parent=0 // pred_check_branch
    %170 = sbr.rel (%p168) target = $region21
  $region20: #{bce_dice_loss.1} parent=0 // pred_region
    %v171 = vld [vmem:[%s58] sm:$0xff]
    %v172 = vld [vmem:[%s58 + $0x8] sm:$0xff]
    %v173 = vld [vmem:[%s70] sm:$0xff]
    %v174 = vld [vmem:[%s70 + $0x8] sm:$0xff]
    %s175 = smul.u32 %s75, 16
    %s176 = sadd.s32 %s175, 0
    %v177 = vlaneseq
    %v178 = vshrl.u32 %v177, 7
    %v179 = vadd.s32 %v178, 8
    %v180 = vstv %s176
    %v181 = vadd.s32 %v180, %v178
    %v182 = vadd.s32 %v180, %v179
    %vm183 = vcmp.lt.s32.totalorder %v181, 16
    %vm184 = vcmp.lt.s32.totalorder %v182, 16
    %v185 = vsel %vm183, %v171, -40.0
    %v186 = vsel %vm184, %v172, -40.0
    %v187 = vsel %vm183, %v173, 0.0
    %v188 = vsel %vm184, %v174, 0.0
    %v189 = vand.u32 2147483647, %v185
    %v190 = vand.u32 2147483647, %v186
    %v191 = vsub.f32 0.0, %v189
    %v192 = vsub.f32 0.0, %v190
    %v193 = vmul.f32 %v191, 1.442695
    %v194 = vpow.pop %v193
    %v195 = vmul.f32 %v192, 1.442695
    %v196 = vpow.pop %v195
    %v197 = vadd.f32 %v194, 1.0
    %v198 = vadd.f32 %v196, 1.0
    %v199 = vrcp.pop %v197
    %v200 = vrcp.pop %v198
    %v201 = vmul.f32 %v197, %v199
    %v202 = vmul.f32 %v198, %v200
    %v203 = vsub.f32 2.0, %v201
    %v204 = vsub.f32 2.0, %v202
    %v205 = vmul.f32 %v199, %v203
    %v206 = vmul.f32 %v200, %v204
    %vm207 = vcmp.ge.f32.partialorder %v185, 0.0
    %vm208 = vcmp.ge.f32.partialorder %v186, 0.0
    %v209 = vmul.f32 %v194, %v205
    %v210 = vmul.f32 %v196, %v206
    %v211 = vsel %vm207, %v205, %v209
    %v212 = vsel %vm208, %v206, %v210
    %v213 = vmax.f32 %v185, 0.0
    %v214 = vmax.f32 %v186, 0.0
    %v215 = vmul.f32 %v185, %v187
    %v216 = vmul.f32 %v186, %v188
    %v217 = vsub.f32 %v213, %v215
    %v218 = vsub.f32 %v214, %v216
    %v219 = vadd.f32 %v194, 1.0
    %v220 = vlog2.pop %v219
    %v221 = vmul.f32 %v220, 0.6931472
    %v222 = vmul.f32 -0.5, %v194
    %v223 = vadd.f32 %v222, 1.0
    %v224 = vmul.f32 %v223, %v194
    %v225 = vand.u32 2147483647, %v194
    %vm226 = vcmp.lt.f32.partialorder %v225, 0.0004427343
    %v227 = vsel %vm226, %v224, %v221
    %v228 = vadd.f32 %v196, 1.0
    %v229 = vlog2.pop %v228
    %v230 = vmul.f32 %v229, 0.6931472
    %v231 = vmul.f32 -0.5, %v196
    %v232 = vadd.f32 %v231, 1.0
    %v233 = vmul.f32 %v232, %v196
    %v234 = vand.u32 2147483647, %v196
    %vm235 = vcmp.lt.f32.partialorder %v234, 0.0004427343
    %v236 = vsel %vm235, %v233, %v230
    %v237 = vadd.f32 %v217, %v227
    %v238 = vadd.f32 %v218, %v236
    %v239 = vadd.f32 %v237, %v238
    %v240 = vadd.f32 %v239, 0.0
    %v241 = vmul.f32 %v211, %v187
    %v242 = vmul.f32 %v212, %v188
    %v243 = vadd.f32 %v241, %v242
    %v244 = vadd.f32 %v243, 0.0
    %v245 = vadd.f32 %v211, %v212
    %v246 = vadd.f32 %v245, 0.0
    %v247 = vadd.f32 %v187, %v188
    %v248 = vadd.f32 %v247, 0.0
    %v249 = vld [vmem:[%s2] sm:$0xff]
    %v250 = vadd.f32 %v249, %v240
    %251 = vst [vmem:[%s2] sm:$0xff] %v250
    %s252 = scalar_lea.vmem %s2, 8
    %v253 = vld [vmem:[%s252] sm:$0xff]
    %v254 = vadd.f32 %v253, %v244
    %255 = vst [vmem:[%s252] sm:$0xff] %v254
    %s256 = scalar_lea.vmem %s2, 16
    %v257 = vld [vmem:[%s256] sm:$0xff]
    %v258 = vadd.f32 %v257, %v246
    %259 = vst [vmem:[%s256] sm:$0xff] %v258
    %s260 = scalar_lea.vmem %s2, 24
    %v261 = vld [vmem:[%s260] sm:$0xff]
    %v262 = vadd.f32 %v261, %v248
    %263 = vst [vmem:[%s260] sm:$0xff] %v262
  $region21: #{bce_dice_loss.1} parent=0 // pred_fallthru
    _
  // Predicated region
  $region22: #{bce_dice_loss.1} parent=0 // pred_check
    _
  $region23: #{bce_dice_loss.1} parent=0 // pred_check_branch
    %265 = sbr.rel (0) target = $region25
  $region24: #{bce_dice_loss.1} parent=0 // pred_region
    _
  $region25: #{bce_dice_loss.1} parent=0 // pred_fallthru
    _
  // Predicated region
  $region26: #{bce_dice_loss.1} parent=0 // pred_check
    _
  $region27: #{bce_dice_loss.1} parent=0 // pred_check_branch
    %267 = sbr.rel (0) target = $region29
  $region28: #{bce_dice_loss.1} parent=0 // pred_region
    _
  $region29: #{bce_dice_loss.1} parent=0 // pred_fallthru
    _

</llo_original>
